<compile_context>
chip_gen: v7x
topology: tpu7x:2x2x1
jax: 0.10.0
libtpu: 0.0.40
codegen_flags: <defaults>
</compile_context>

<pallas_src>
import functools
import math

import jax
import jax.numpy as jnp
from jax.experimental import pallas as pl
from jax.experimental.pallas import tpu as pltpu

LN_EPS = 1e-5
_INV_SQRT2 = 1.0 / math.sqrt(2.0)


def _audio_projector_kernel(x_ref, w1_ref, b1_ref, w2_ref, lnp_ref,
                            o_ref, *scratch, nk, use_tanh_gelu):
    # x_ref:   (tile_m, A)       input rows (caller dtype, e.g. bf16)
    # w1_ref:  (A, tile_k)       column block of W1
    # b1_ref:  (1, tile_k) f32   matching slice of bias1
    # w2_ref:  (tile_k, H)       row block of W2
    # lnp_ref: (3, H) f32        packed [b2; gamma; beta]
    # o_ref:   (tile_m, H)       output rows (caller dtype)
    # scratch: ((tile_m, H) f32 accumulator,) only when nk > 1

    # Linear1 column block on the MXU (f32 accumulation); bias + GELU in f32.
    h = jnp.dot(x_ref[...], w1_ref[...], preferred_element_type=jnp.float32)
    h = h + b1_ref[...]
    if use_tanh_gelu:
        # tanh GELU runs on the EUP (its own bundle slot); deviates slightly
        # from torch.nn.GELU()'s erf default.
        h = jax.nn.gelu(h, approximate=True)
    else:
        h = 0.5 * h * (1.0 + jax.lax.erf(h * _INV_SQRT2))

    # Linear2 partial product: (tile_m, tile_k) @ (tile_k, H), f32 accumulate.
    part = jnp.dot(h.astype(w2_ref.dtype), w2_ref[...],
                   preferred_element_type=jnp.float32)

    def _finalize(prev):
        # Fold the last partial product straight into the epilogue (no final
        # accumulator write).  One-pass statistics keep only per-row scalars
        # live instead of several (tile_m, H) f32 temporaries.
        y = prev + part + lnp_ref[0:1, :]                     # + bias2
        inv_h = 1.0 / y.shape[-1]
        mean = jnp.sum(y, axis=-1, keepdims=True) * inv_h
        ex2 = jnp.sum(y * y, axis=-1, keepdims=True) * inv_h
        var = jnp.maximum(ex2 - mean * mean, 0.0)
        inv_std = jax.lax.rsqrt(var + LN_EPS)
        o_ref[...] = ((y - mean) * inv_std * lnp_ref[1:2, :]
                      + lnp_ref[2:3, :]).astype(o_ref.dtype)

    if nk == 1:
        # Single K step: no accumulator traffic at all.
        _finalize(0.0)
    else:
        acc_ref = scratch[0]
        k = pl.program_id(1)

        @pl.when(k == 0)
        def _first():                 # first partial: store only (no zero-init)
            acc_ref[...] = part

        if nk > 2:
            @pl.when(jnp.logical_and(k > 0, k < nk - 1))
            def _mid():
                acc_ref[...] += part

        @pl.when(k == nk - 1)
        def _last():                  # last partial: read acc once, finalize
            _finalize(acc_ref[...])


def _round_up(n, m):
    return -(-n // m) * m


def _pick_tile_k(H, target):
    # Largest multiple of 128 that divides H and is <= target; single K step
    # if H is not lane-aligned or already small.
    if H % 128 != 0 or H <= target:
        return H
    tk = target - (target % 128)
    while H % tk:
        tk -= 128
    return tk


def _vmem_capacity_bytes():
    try:
        cap = getattr(pltpu.get_tpu_info(), "vmem_capacity_bytes", None)
        if cap:
            return int(cap)
    except Exception:
        pass
    return 64 << 20       # conservative default (v7x per-TensorCore VMEM)


def _vmem_estimate(tile_m, tile_k, A, H, x_isz, w_isz, o_isz):
    return (2 * tile_m * A * x_isz        # x tile (double-buffered)
            + 2 * A * tile_k * w_isz      # W1 column block
            + 2 * tile_k * 4              # b1 slice (f32)
            + 2 * tile_k * H * w_isz      # W2 row block
            + 2 * 3 * H * 4               # packed LN params
            + 2 * tile_m * H * o_isz      # output tile
            + tile_m * H * 4              # f32 accumulator scratch
            + tile_m * H * 4)             # epilogue temporaries headroom


def _select_plan(M, A, H, x_isz, w_isz, o_isz, tile_m, tile_k):
    vmem_cap = _vmem_capacity_bytes()
    big_vmem = vmem_cap >= (100 << 20)        # v5e / v6e (128 MiB physical)
    # Generation-aware caps: larger tiles on 128 MiB parts, tighter budget on
    # v7x's 64 MiB per-TensorCore VMEM.
    m_cap = 1024 if big_vmem else 512
    k_target = 1024 if big_vmem else 512
    budget = (96 << 20) if big_vmem else (56 << 20)
    usable = budget - (8 << 20)               # compiler-scratch headroom

    auto_k = tile_k is None
    auto_m = tile_m is None
    if auto_k:
        tile_k = _pick_tile_k(H, k_target)
    if auto_m:
        m8 = _round_up(M, 8)
        if m8 <= m_cap:
            # Split a single covering tile into two so both TensorCores get
            # work from the "parallel" M axis on megacore parts.
            tile_m = _round_up(-(-m8 // 2), 8) if m8 >= 128 else m8
        else:
            tile_m = m_cap

    if auto_m or auto_k:
        # Shrink until the plan fits VMEM.  Prefer shrinking tile_k (never
        # below 512 here) before tile_m: tile_m sets weight-reuse arithmetic
        # intensity; tile_k only changes accumulator RMW traffic.
        while _vmem_estimate(tile_m, tile_k, A, H, x_isz, w_isz, o_isz) > usable:
            if (auto_k and tile_k > 512 and tile_k % 256 == 0
                    and H % (tile_k // 2) == 0):
                tile_k //= 2
            elif auto_m and tile_m > 64:
                tile_m = max(64, _round_up(tile_m // 2, 8))
            else:
                break

    est = _vmem_estimate(tile_m, tile_k, A, H, x_isz, w_isz, o_isz)
    vmem_limit = max(32 << 20, min(budget, int(est * 1.25) + (8 << 20)))
    return tile_m, tile_k, vmem_limit


@functools.partial(jax.jit,
                   static_argnames=("tile_m", "tile_k", "use_tanh_gelu"))
def audio_projector(x, w1, b1, w2, b2, gamma, beta, *,
                    tile_m=None, tile_k=None, use_tanh_gelu=False):
    """x: [batch, seq, A] -> [batch, seq, H].

    w1: (A, H), w2: (H, H)  (pre-transposed to (in, out) layout),
    b1/b2/gamma/beta: (H,).
    """
    B, S, A = x.shape
    H = w1.shape[1]
    M = B * S

    tile_m, tile_k, vmem_limit = _select_plan(
        M, A, H, x.dtype.itemsize, w1.dtype.itemsize, x.dtype.itemsize,
        tile_m, tile_k)
    assert tile_m % 8 == 0, "tile_m must be a multiple of 8"
    assert H % tile_k == 0, "tile_k must divide the hidden size"
    nk = H // tile_k

    # Zero-pad the token dim so the M grid axis has no partial tile; zero rows
    # survive bias/GELU/LayerNorm (eps avoids div-by-zero) and are sliced off.
    m_pad = _round_up(M, tile_m)
    x2d = x.reshape(M, A)
    if m_pad != M:
        x2d = jnp.pad(x2d, ((0, m_pad - M), (0, 0)))

    # Biases / LN params always in f32, regardless of caller dtype.
    b1_2d = b1.reshape(1, H).astype(jnp.float32)
    ln_params = jnp.stack([b2.reshape(H), gamma.reshape(H),
                           beta.reshape(H)]).astype(jnp.float32)     # (3, H)

    grid = (m_pad // tile_m, nk)
    scratch_shapes = ([pltpu.VMEM((tile_m, H), jnp.float32)] if nk > 1 else [])

    kernel = functools.partial(_audio_projector_kernel, nk=nk,
                               use_tanh_gelu=use_tanh_gelu)

    out2d = pl.pallas_call(
        kernel,
        out_shape=jax.ShapeDtypeStruct((m_pad, H), x.dtype),
        grid_spec=pltpu.PrefetchScalarGridSpec(
            num_scalar_prefetch=0,
            grid=grid,
            in_specs=[
                pl.BlockSpec((tile_m, A), lambda i, k: (i, 0)),   # x rows
                pl.BlockSpec((A, tile_k), lambda i, k: (0, k)),   # W1 cols
                pl.BlockSpec((1, tile_k), lambda i, k: (0, k)),   # b1 slice
                pl.BlockSpec((tile_k, H), lambda i, k: (k, 0)),   # W2 rows
                pl.BlockSpec((3, H), lambda i, k: (0, 0)),        # b2/gamma/beta
            ],
            out_specs=pl.BlockSpec((tile_m, H), lambda i, k: (i, 0)),
            scratch_shapes=scratch_shapes,
        ),
        compiler_params=pltpu.CompilerParams(
            dimension_semantics=("parallel", "arbitrary"),
            vmem_limit_bytes=vmem_limit),
    )(x2d, w1, b1_2d, w2, ln_params)

    if m_pad != M:
        out2d = out2d[:M]
    return out2d.reshape(B, S, H)


def _xavier_uniform(key, fan_in, fan_out, dtype=jnp.float32):
    # Matches torch.nn.init.xavier_uniform_ for a Linear weight (out, in);
    # generated directly in (in, out) layout for the kernel.
    bound = math.sqrt(6.0 / (fan_in + fan_out))
    return jax.random.uniform(key, (fan_in, fan_out), dtype,
                              minval=-bound, maxval=bound)


def _reference(x2d, w1, b1, w2, b2, gamma, beta):
    h = x2d.astype(jnp.float32) @ w1.astype(jnp.float32) + b1
    h = 0.5 * h * (1.0 + jax.lax.erf(h * _INV_SQRT2))
    y = h @ w2.astype(jnp.float32) + b2
    mean = jnp.mean(y, axis=-1, keepdims=True)
    var = jnp.mean((y - mean) ** 2, axis=-1, keepdims=True)
    return (y - mean) / jnp.sqrt(var + LN_EPS) * gamma + beta


if __name__ == "__main__":
    # Small shapes consistent with forward(): [batch, seq_len, audio_hidden].
    batch, seq_len = 2, 8
    audio_hidden_size = 128      # stands in for 1280
    hidden_size = 256            # stands in for 5120

    key = jax.random.PRNGKey(0)
    kx, kw1, kw2 = jax.random.split(key, 3)

    x = jax.random.normal(kx, (batch, seq_len, audio_hidden_size), jnp.float32)

    # Params per _init_weights(): xavier_uniform weights, zero biases,
    # LayerNorm gamma=1 / beta=0.
    w1 = _xavier_uniform(kw1, audio_hidden_size, hidden_size)    # (A, H)
    b1 = jnp.zeros((hidden_size,), jnp.float32)
    w2 = _xavier_uniform(kw2, hidden_size, hidden_size)          # (H, H)
    b2 = jnp.zeros((hidden_size,), jnp.float32)
    gamma = jnp.ones((hidden_size,), jnp.float32)
    beta = jnp.zeros((hidden_size,), jnp.float32)

    ref = _reference(x.reshape(-1, audio_hidden_size),
                     w1, b1, w2, b2, gamma, beta)

    # f32 path, auto plan (single K step -> no accumulator traffic).
    out = jax.block_until_ready(
        audio_projector(x, w1, b1, w2, b2, gamma, beta))
    assert out.shape == (batch, seq_len, hidden_size), out.shape
    err = float(jnp.max(jnp.abs(out.reshape(-1, hidden_size) - ref)))
    assert err < 1e-4, err

    # f32 path with tile_k=128 to exercise the streamed K accumulation
    # (first-store / last-step fused finalize).
    out_k = jax.block_until_ready(
        audio_projector(x, w1, b1, w2, b2, gamma, beta, tile_k=128))
    err_k = float(jnp.max(jnp.abs(out_k.reshape(-1, hidden_size) - ref)))
    assert err_k < 1e-4, err_k

    # bf16 MXU-operand path (production dtype; f32 accumulation inside).
    out_bf16 = jax.block_until_ready(
        audio_projector(x.astype(jnp.bfloat16), w1.astype(jnp.bfloat16),
                        b1, w2.astype(jnp.bfloat16), b2, gamma, beta))
    err_bf16 = float(jnp.max(jnp.abs(
        out_bf16.astype(jnp.float32).reshape(-1, hidden_size) - ref)))
    assert err_bf16 < 1.5e-1, err_bf16

    # Ragged token count exercises the zero-padded partial M tile.
    x_odd = x[:, :5, :]
    out_odd = jax.block_until_ready(
        audio_projector(x_odd, w1, b1, w2, b2, gamma, beta, tile_k=128))
    ref_odd = _reference(x_odd.reshape(-1, audio_hidden_size),
                         w1, b1, w2, b2, gamma, beta)
    err_odd = float(jnp.max(jnp.abs(
        out_odd.reshape(-1, hidden_size) - ref_odd)))
    assert err_odd < 1e-4, err_odd

    # Optional EUP tanh-GELU path: just make sure it compiles and runs.
    out_tanh = jax.block_until_ready(
        audio_projector(x, w1, b1, w2, b2, gamma, beta, use_tanh_gelu=True))
    assert out_tanh.shape == (batch, seq_len, hidden_size)
    assert bool(jnp.all(jnp.isfinite(out_tanh)))

    print("KERNEL_OK")
</pallas_src>

<mosaic_0001>
module attributes {stable_mosaic.version = 11 : i64} {
  func.func @_audio_projector_kernel(%arg0: i32, %arg1: i32, %arg2: memref<16x128xf32, #tpu.memory_space<vmem>>, %arg3: memref<128x256xf32, #tpu.memory_space<vmem>>, %arg4: memref<1x256xf32, #tpu.memory_space<vmem>>, %arg5: memref<256x256xf32, #tpu.memory_space<vmem>>, %arg6: memref<3x256xf32, #tpu.memory_space<vmem>>, %arg7: memref<16x256xf32, #tpu.memory_space<vmem>>) attributes {dimension_semantics = [#tpu.dimension_semantics<parallel>, #tpu.dimension_semantics<arbitrary>], iteration_bounds = array<i64: 1, 1>, scalar_prefetch = 0 : i64, scratch_operands = 0 : i64, tpu.core_type = #tpu.core_type<tc>, window_params = [{transform_indices = @transform_0, window_bounds = array<i64: 16, 128>}, {transform_indices = @transform_1, window_bounds = array<i64: 128, 256>}, {transform_indices = @transform_2, window_bounds = array<i64: 1, 256>}, {transform_indices = @transform_3, window_bounds = array<i64: 256, 256>}, {pipeline_mode = #tpu.pipeline_mode<synchronous>, transform_indices = @transform_4, window_bounds = array<i64: 3, 256>}, {transform_indices = @transform_5, window_bounds = array<i64: 16, 256>}]} {
    %c0 = arith.constant 0 : index
    %c0_0 = arith.constant 0 : index
    %0 = vector.load %arg2[%c0, %c0_0] : memref<16x128xf32, #tpu.memory_space<vmem>>, vector<16x128xf32>
    %c0_1 = arith.constant 0 : index
    %c0_2 = arith.constant 0 : index
    %1 = vector.load %arg3[%c0_1, %c0_2] : memref<128x256xf32, #tpu.memory_space<vmem>>, vector<128x256xf32>
    %cst = arith.constant dense<0.000000e+00> : vector<16x256xf32>
    %2 = tpu.matmul %0, %1, %cst {dimension_numbers = #tpu.dot_dimension_numbers<[1], [0], [0], [1], [0, 0, 1, 1], [], []>} : vector<16x128xf32>, vector<128x256xf32>, vector<16x256xf32> -> vector<16x256xf32>
    %c0_3 = arith.constant 0 : index
    %c0_4 = arith.constant 0 : index
    %3 = vector.load %arg4[%c0_3, %c0_4] : memref<1x256xf32, #tpu.memory_space<vmem>>, vector<1x256xf32>
    %4 = vector.broadcast %3 : vector<1x256xf32> to vector<16x256xf32>
    %5 = arith.addf %2, %4 : vector<16x256xf32>
    %cst_5 = arith.constant 5.000000e-01 : f32
    %6 = vector.broadcast %cst_5 : f32 to vector<16x256xf32>
    %7 = arith.mulf %6, %5 : vector<16x256xf32>
    %cst_6 = arith.constant 0.707106769 : f32
    %8 = vector.broadcast %cst_6 : f32 to vector<16x256xf32>
    %9 = arith.mulf %5, %8 : vector<16x256xf32>
    %10 = math.erf %9 : vector<16x256xf32>
    %cst_7 = arith.constant 1.000000e+00 : f32
    %11 = vector.broadcast %cst_7 : f32 to vector<16x256xf32>
    %12 = arith.addf %11, %10 : vector<16x256xf32>
    %13 = arith.mulf %7, %12 : vector<16x256xf32>
    %c0_8 = arith.constant 0 : index
    %c0_9 = arith.constant 0 : index
    %14 = vector.load %arg5[%c0_8, %c0_9] : memref<256x256xf32, #tpu.memory_space<vmem>>, vector<256x256xf32>
    %cst_10 = arith.constant dense<0.000000e+00> : vector<16x256xf32>
    %15 = tpu.matmul %13, %14, %cst_10 {dimension_numbers = #tpu.dot_dimension_numbers<[1], [0], [0], [1], [0, 0, 1, 1], [], []>} : vector<16x256xf32>, vector<256x256xf32>, vector<16x256xf32> -> vector<16x256xf32>
    %cst_11 = arith.constant 0.000000e+00 : f32
    %16 = vector.broadcast %cst_11 : f32 to vector<16x256xf32>
    %17 = arith.addf %16, %15 : vector<16x256xf32>
    %c0_12 = arith.constant 0 : index
    %c0_13 = arith.constant 0 : index
    %18 = vector.load %arg6[%c0_12, %c0_13] : memref<3x256xf32, #tpu.memory_space<vmem>>, vector<1x256xf32>
    %19 = vector.broadcast %18 : vector<1x256xf32> to vector<16x256xf32>
    %20 = arith.addf %17, %19 : vector<16x256xf32>
    %cst_14 = arith.constant dense<0.000000e+00> : vector<16xf32>
    %21 = vector.multi_reduction <add>, %20, %cst_14 [1] : vector<16x256xf32> to vector<16xf32>
    %22 = vector.shape_cast %21 : vector<16xf32> to vector<16x1xf32>
    %cst_15 = arith.constant 3.906250e-03 : f32
    %23 = vector.broadcast %cst_15 : f32 to vector<16x1xf32>
    %24 = arith.mulf %22, %23 : vector<16x1xf32>
    %25 = arith.mulf %20, %20 : vector<16x256xf32>
    %cst_16 = arith.constant dense<0.000000e+00> : vector<16xf32>
    %26 = vector.multi_reduction <add>, %25, %cst_16 [1] : vector<16x256xf32> to vector<16xf32>
    %27 = vector.shape_cast %26 : vector<16xf32> to vector<16x1xf32>
    %cst_17 = arith.constant 3.906250e-03 : f32
    %28 = vector.broadcast %cst_17 : f32 to vector<16x1xf32>
    %29 = arith.mulf %27, %28 : vector<16x1xf32>
    %30 = arith.mulf %24, %24 : vector<16x1xf32>
    %31 = arith.subf %29, %30 : vector<16x1xf32>
    %cst_18 = arith.constant 0.000000e+00 : f32
    %32 = vector.broadcast %cst_18 : f32 to vector<16x1xf32>
    %33 = arith.maximumf %31, %32 : vector<16x1xf32>
    %cst_19 = arith.constant 9.99999974E-6 : f32
    %34 = vector.broadcast %cst_19 : f32 to vector<16x1xf32>
    %35 = arith.addf %33, %34 : vector<16x1xf32>
    %36 = math.rsqrt %35 : vector<16x1xf32>
    %37 = vector.broadcast %24 : vector<16x1xf32> to vector<16x256xf32>
    %38 = arith.subf %20, %37 : vector<16x256xf32>
    %39 = vector.broadcast %36 : vector<16x1xf32> to vector<16x256xf32>
    %40 = arith.mulf %38, %39 : vector<16x256xf32>
    %c1 = arith.constant 1 : index
    %c0_20 = arith.constant 0 : index
    %41 = vector.load %arg6[%c1, %c0_20] : memref<3x256xf32, #tpu.memory_space<vmem>>, vector<1x256xf32>
    %42 = vector.broadcast %41 : vector<1x256xf32> to vector<16x256xf32>
    %43 = arith.mulf %40, %42 : vector<16x256xf32>
    %c2 = arith.constant 2 : index
    %c0_21 = arith.constant 0 : index
    %44 = vector.load %arg6[%c2, %c0_21] : memref<3x256xf32, #tpu.memory_space<vmem>>, vector<1x256xf32>
    %45 = vector.broadcast %44 : vector<1x256xf32> to vector<16x256xf32>
    %46 = arith.addf %43, %45 : vector<16x256xf32>
    %c0_22 = arith.constant 0 : index
    %c0_23 = arith.constant 0 : index
    %47 = vector.load %arg7[%c0_22, %c0_23] : memref<16x256xf32, #tpu.memory_space<vmem>>, vector<16x256xf32>
    tpu.vector_store %arg7[%c0_22, %c0_23], %46 {strides = array<i32>} : memref<16x256xf32, #tpu.memory_space<vmem>>, vector<16x256xf32>,
    return
  }
  func.func @transform_0(%arg0: i32, %arg1: i32) -> (i32, i32) {
    %c0_i32 = arith.constant 0 : i32
    %c0_i32_0 = arith.constant 0 : i32
    return %arg0, %c0_i32 : i32, i32
  }
  func.func @transform_1(%arg0: i32, %arg1: i32) -> (i32, i32) {
    %c0_i32 = arith.constant 0 : i32
    %c0_i32_0 = arith.constant 0 : i32
    return %c0_i32, %arg1 : i32, i32
  }
  func.func @transform_2(%arg0: i32, %arg1: i32) -> (i32, i32) {
    %c0_i32 = arith.constant 0 : i32
    %c0_i32_0 = arith.constant 0 : i32
    return %c0_i32, %arg1 : i32, i32
  }
  func.func @transform_3(%arg0: i32, %arg1: i32) -> (i32, i32) {
    %c0_i32 = arith.constant 0 : i32
    %c0_i32_0 = arith.constant 0 : i32
    return %arg1, %c0_i32 : i32, i32
  }
  func.func @transform_4(%arg0: i32, %arg1: i32) -> (i32, i32) {
    %c0_i32 = arith.constant 0 : i32
    %c0_i32_0 = arith.constant 0 : i32
    %c0_i32_1 = arith.constant 0 : i32
    return %c0_i32, %c0_i32_0 : i32, i32
  }
  func.func @transform_5(%arg0: i32, %arg1: i32) -> (i32, i32) {
    %c0_i32 = arith.constant 0 : i32
    %c0_i32_0 = arith.constant 0 : i32
    return %arg0, %c0_i32 : i32, i32
  }
}

</mosaic_0001>

<llo_original>
// kernel: audio_projector.1
$region0: #{audio_projector.1}
  #allocation0 [shape = 'u32[]', space=smem, size = 0x4, offset = 0x4, fixed_abs, tag = 'smem constant byte address 0x4 - core index']
  #allocation1 [shape = 'u32[144,128]{1,0:T(1,128)}', space=vmem, size = 0x12000, scoped, tag = 'internal scratch']
  %s0 = inlined_call_operand.vmem [shape: f32[16,128], index: 0, kind: input, shape index: {}]
  %s1 = inlined_call_operand.hbm [shape: f32[128,256], index: 1, kind: input, shape index: {}]
  %s2 = inlined_call_operand.vmem [shape: f32[1,256], index: 2, kind: input, shape index: {}]
  %s3 = inlined_call_operand.hbm [shape: f32[256,256], index: 3, kind: input, shape index: {}]
  %s4 = inlined_call_operand.vmem [shape: f32[3,256], index: 4, kind: input, shape index: {}]
  %s5 = inlined_call_operand.hbm [shape: f32[16,256], index: 5, kind: output, shape index: {}]
  %s6 = sld [smem:[#allocation0]]
  $region38: #{audio_projector.1} parent=0
    _
  %s8 = ssub.s32 1, %s6
  %s9 = scalar_select 0, %s8, %s6
  $region1: #{audio_projector.1} parent=0
    #allocation2 [shape = 'u8[131072]{0}', space=vmem, size = 0x20000, scoped, tag = 'input window, operand 1, single buffered']
    #allocation3 [shape = 's32[1]{0}', space=sflag, size = 0x4, scoped, tag = 'scoped memory for audio_projector.1']
    #allocation4 [shape = 's32[1]{0}', space=sflag, size = 0x4, scoped, tag = 'scoped memory for audio_projector.1']
    #allocation5 [shape = 'u8[262144]{0}', space=vmem, size = 0x40000, scoped, tag = 'input window, operand 3, single buffered']
    #allocation6 [shape = 's32[1]{0}', space=sflag, size = 0x4, scoped, tag = 'scoped memory for audio_projector.1']
    #allocation7 [shape = 'u8[16384]{0}', space=vmem, size = 0x4000, scoped, tag = 'output window, operand 0, single buffered']
    %10 = vsyncpa [#allocation3], 0
    %11 = vsyncpa [#allocation6], 0
    %12 = vsyncpa [#allocation4], 0
    // Predicated region
    $region2: #{audio_projector.1} parent=1 // pred_check
      _
    $region3: #{audio_projector.1} parent=1 // pred_check_branch
      %14 = sbr.rel (0) target = $region5
    $region4: #{audio_projector.1} parent=1 // pred_region
      _
    $region5: #{audio_projector.1} parent=1 // pred_fallthru
      _
    // Predicated region
    $region6: #{audio_projector.1} parent=1 // pred_check
      _
    $region7: #{audio_projector.1} parent=1 // pred_check_branch
      %16 = sbr.rel (0) target = $region9
    $region8: #{audio_projector.1} parent=1 // pred_region
      %s18 = ssub.s32 4096, 4096
      %19 = vsyncadd [#allocation3], %s18
      %s20 = sshll.u32 [#allocation2], 4
      %s21 = int_to_ptr.vmem [resolvable:$true] %s20
      %26 = dma.hbm_to_vmem [thread:$0]  %s1, 4096, %s21, [#allocation3], 256, 256, 16
    $region9: #{audio_projector.1} parent=1 // pred_fallthru
      _
    // Predicated region
    $region10: #{audio_projector.1} parent=1 // pred_check
      _
    $region11: #{audio_projector.1} parent=1 // pred_check_branch
      %28 = sbr.rel (0) target = $region13
    $region12: #{audio_projector.1} parent=1 // pred_region
      _
    $region13: #{audio_projector.1} parent=1 // pred_fallthru
      _
    // Predicated region
    $region14: #{audio_projector.1} parent=1 // pred_check
      _
    $region15: #{audio_projector.1} parent=1 // pred_check_branch
      %30 = sbr.rel (0) target = $region17
    $region16: #{audio_projector.1} parent=1 // pred_region
      %s32 = ssub.s32 8192, 8192
      %33 = vsyncadd [#allocation6], %s32
      %s34 = sshll.u32 [#allocation5], 4
      %s35 = int_to_ptr.vmem [resolvable:$true] %s34
      %40 = dma.hbm_to_vmem [thread:$0]  %s3, 8192, %s35, [#allocation6], 256, 256, 16
    $region17: #{audio_projector.1} parent=1 // pred_fallthru
      _
    // Predicated region
    $region18: #{audio_projector.1} parent=1 // pred_check
      _
    $region19: #{audio_projector.1} parent=1 // pred_check_branch
      %42 = sbr.rel (0) target = $region21
    $region20: #{audio_projector.1} parent=1 // pred_region
      _
    $region21: #{audio_projector.1} parent=1 // pred_fallthru
      _
    // Predicated region
    $region22: #{audio_projector.1} parent=1 // pred_check
      _
    $region23: #{audio_projector.1} parent=1 // pred_check_branch
      %44 = sbr.rel (0) target = $region25
    $region24: #{audio_projector.1} parent=1 // pred_region
      %45 = dma.done [#allocation3], 4096
    $region25: #{audio_projector.1} parent=1 // pred_fallthru
      _
    // Predicated region
    $region26: #{audio_projector.1} parent=1 // pred_check
      _
    $region27: #{audio_projector.1} parent=1 // pred_check_branch
      %47 = sbr.rel (0) target = $region29
    $region28: #{audio_projector.1} parent=1 // pred_region
      %48 = dma.done [#allocation6], 8192
    $region29: #{audio_projector.1} parent=1 // pred_fallthru
      _
    %v49 = vld [vmem:[%s0] sm:$0xff]
    %v50 = vld [vmem:[%s0 + $0x8] sm:$0xff]
    %v51 = vld [vmem:[#allocation2] sm:$0xff]
    %v52 = vld [vmem:[#allocation2 + $0x8] sm:$0xff]
    %v53 = vld [vmem:[#allocation2 + $0x10] sm:$0xff]
    %v54 = vld [vmem:[#allocation2 + $0x18] sm:$0xff]
    %v55 = vld [vmem:[#allocation2 + $0x20] sm:$0xff]
    %v56 = vld [vmem:[#allocation2 + $0x28] sm:$0xff]
    %v57 = vld [vmem:[#allocation2 + $0x30] sm:$0xff]
    %v58 = vld [vmem:[#allocation2 + $0x38] sm:$0xff]
    %v59 = vld [vmem:[#allocation2 + $0x40] sm:$0xff]
    %v60 = vld [vmem:[#allocation2 + $0x48] sm:$0xff]
    %v61 = vld [vmem:[#allocation2 + $0x50] sm:$0xff]
    %v62 = vld [vmem:[#allocation2 + $0x58] sm:$0xff]
    %v63 = vld [vmem:[#allocation2 + $0x60] sm:$0xff]
    %v64 = vld [vmem:[#allocation2 + $0x68] sm:$0xff]
    %v65 = vld [vmem:[#allocation2 + $0x70] sm:$0xff]
    %v66 = vld [vmem:[#allocation2 + $0x78] sm:$0xff]
    %v67 = vld [vmem:[#allocation2 + $0x80] sm:$0xff]
    %v68 = vld [vmem:[#allocation2 + $0x88] sm:$0xff]
    %v69 = vld [vmem:[#allocation2 + $0x90] sm:$0xff]
    %v70 = vld [vmem:[#allocation2 + $0x98] sm:$0xff]
    %v71 = vld [vmem:[#allocation2 + $0xa0] sm:$0xff]
    %v72 = vld [vmem:[#allocation2 + $0xa8] sm:$0xff]
    %v73 = vld [vmem:[#allocation2 + $0xb0] sm:$0xff]
    %v74 = vld [vmem:[#allocation2 + $0xb8] sm:$0xff]
    %v75 = vld [vmem:[#allocation2 + $0xc0] sm:$0xff]
    %v76 = vld [vmem:[#allocation2 + $0xc8] sm:$0xff]
    %v77 = vld [vmem:[#allocation2 + $0xd0] sm:$0xff]
    %v78 = vld [vmem:[#allocation2 + $0xd8] sm:$0xff]
    %v79 = vld [vmem:[#allocation2 + $0xe0] sm:$0xff]
    %v80 = vld [vmem:[#allocation2 + $0xe8] sm:$0xff]
    %v81 = vld [vmem:[#allocation2 + $0xf0] sm:$0xff]
    %v82 = vld [vmem:[#allocation2 + $0xf8] sm:$0xff]
    %v83 = vld [vmem:[%s2] sm:$0x3]
    %v85 = vlaneseq
    %v86 = vshrl.u32 %v85, 7
    %v87 = vsub.s32 0, %v86
    %v88 = vrot.slane %v83, %v87
    %v89 = vlaneseq
    %v90 = vshrl.u32 %v89, 7
    %v91 = vsub.s32 1, %v90
    %v92 = vrot.slane %v83, %v91
    %95 = vmatprep.subr.mxu0 %v52
    %96 = vmatpush1.msra.mxu0 %v51
    %97 = vmatprep.subr.mxu0 %v54
    %98 = vmatpush1.msra.mxu0 %v53
    %99 = vmatprep.subr.mxu0 %v56
    %100 = vmatpush1.msra.mxu0 %v55
    %101 = vmatprep.subr.mxu0 %v58
    %102 = vmatpush1.msra.mxu0 %v57
    %103 = vmatprep.subr.mxu0 %v60
    %104 = vmatpush1.msra.mxu0 %v59
    %105 = vmatprep.subr.mxu0 %v62
    %106 = vmatpush1.msra.mxu0 %v61
    %107 = vmatprep.subr.mxu0 %v64
    %108 = vmatpush1.msra.mxu0 %v63
    %109 = vmatprep.subr.mxu0 %v66
    %110 = vmatpush1.msra.mxu0 %v65
    %111 = vmatprep.subr.mxu0 %v68
    %112 = vmatpush1.msra.mxu0 %v67
    %113 = vmatprep.subr.mxu0 %v70
    %114 = vmatpush1.msra.mxu0 %v69
    %115 = vmatprep.subr.mxu0 %v72
    %116 = vmatpush1.msra.mxu0 %v71
    %117 = vmatprep.subr.mxu0 %v74
    %118 = vmatpush1.msra.mxu0 %v73
    %119 = vmatprep.subr.mxu0 %v76
    %120 = vmatpush1.msra.mxu0 %v75
    %121 = vmatprep.subr.mxu0 %v78
    %122 = vmatpush1.msra.mxu0 %v77
    %123 = vmatprep.subr.mxu0 %v80
    %124 = vmatpush1.msra.mxu0 %v79
    %125 = vmatprep.subr.mxu0 %v82
    %126 = vmatpush1.msra.mxu0 %v81
    %127 = vmatprep.subr.mxu0 0.0
    %128 = vmatpush1.msra.mxu0 0.0
    %129 = vmatprep.subr.mxu0 0.0
    %130 = vmatpush1.msra.mxu0 0.0
    %131 = vmatprep.subr.mxu0 0.0
    %132 = vmatpush1.msra.mxu0 0.0
    %133 = vmatprep.subr.mxu0 0.0
    %134 = vmatpush1.msra.mxu0 0.0
    %135 = vmatprep.subr.mxu0 0.0
    %136 = vmatpush1.msra.mxu0 0.0
    %137 = vmatprep.subr.mxu0 0.0
    %138 = vmatpush1.msra.mxu0 0.0
    %139 = vmatprep.subr.mxu0 0.0
    %140 = vmatpush1.msra.mxu0 0.0
    %141 = vmatprep.subr.mxu0 0.0
    %142 = vmatpush1.msra.mxu0 0.0
    %143 = vmatprep.subr.mxu0 0.0
    %144 = vmatpush1.msra.mxu0 0.0
    %145 = vmatprep.subr.mxu0 0.0
    %146 = vmatpush1.msra.mxu0 0.0
    %147 = vmatprep.subr.mxu0 0.0
    %148 = vmatpush1.msra.mxu0 0.0
    %149 = vmatprep.subr.mxu0 0.0
    %150 = vmatpush1.msra.mxu0 0.0
    %151 = vmatprep.subr.mxu0 0.0
    %152 = vmatpush1.msra.mxu0 0.0
    %153 = vmatprep.subr.mxu0 0.0
    %154 = vmatpush1.msra.mxu0 0.0
    %155 = vmatprep.subr.mxu0 0.0
    %156 = vmatpush1.msra.mxu0 0.0
    %157 = vmatprep.subr.mxu0 0.0
    %158 = vmatpush1.msra.mxu0 0.0
    %159 = vmatprep.mubr.f32.mxu0 0.0
    %160 = vmatmul.mubr.f32.gmra.mrb[0].mxu0 %v49
    %v161 = vpop.f32.mrb[0].mxu0
    %v162 = vadd.f32 %v88, %v161
    %v163 = vpop.f32.mrb[0].mxu0
    %v164 = vadd.f32 %v92, %v163
    %165 = vmatprep.mubr.f32.mxu0 0.0
    %166 = vmatmul.mubr.f32.gmra.mrb[0].mxu0 %v50
    %v167 = vpop.f32.mrb[0].mxu0
    %v168 = vadd.f32 %v88, %v167
    %v169 = vpop.f32.mrb[0].mxu0
    %v170 = vadd.f32 %v92, %v169
    %171 = vdwg.mxu0
    %v172 = vmul.f32 %v162, 0.5
    %v173 = vmul.f32 %v164, 0.5
    %v174 = vmul.f32 %v168, 0.5
    %v175 = vmul.f32 %v170, 0.5
    %v176 = vmul.f32 %v162, 0.70710677
    %v177 = vmul.f32 %v164, 0.70710677
    %v178 = vmul.f32 %v168, 0.70710677
    %v179 = vmul.f32 %v170, 0.70710677
    %v180 = verf.f32.pop %v176
    %v181 = verf.f32.pop %v177
    %v182 = verf.f32.pop %v178
    %v183 = verf.f32.pop %v179
    %v184 = vadd.f32 %v180, 1.0
    %v185 = vadd.f32 %v181, 1.0
    %v186 = vadd.f32 %v182, 1.0
    %v187 = vadd.f32 %v183, 1.0
    %v188 = vmul.f32 %v172, %v184
    %v189 = vmul.f32 %v173, %v185
    %v190 = vmul.f32 %v174, %v186
    %v191 = vmul.f32 %v175, %v187
    %v192 = vld [vmem:[#allocation5] sm:$0xff]
    %v193 = vld [vmem:[#allocation5 + $0x8] sm:$0xff]
    %v194 = vld [vmem:[#allocation5 + $0x10] sm:$0xff]
    %v195 = vld [vmem:[#allocation5 + $0x18] sm:$0xff]
    %v196 = vld [vmem:[#allocation5 + $0x20] sm:$0xff]
    %v197 = vld [vmem:[#allocation5 + $0x28] sm:$0xff]
    %v198 = vld [vmem:[#allocation5 + $0x30] sm:$0xff]
    %v199 = vld [vmem:[#allocation5 + $0x38] sm:$0xff]
    %v200 = vld [vmem:[#allocation5 + $0x40] sm:$0xff]
    %v201 = vld [vmem:[#allocation5 + $0x48] sm:$0xff]
    %v202 = vld [vmem:[#allocation5 + $0x50] sm:$0xff]
    %v203 = vld [vmem:[#allocation5 + $0x58] sm:$0xff]
    %v204 = vld [vmem:[#allocation5 + $0x60] sm:$0xff]
    %v205 = vld [vmem:[#allocation5 + $0x68] sm:$0xff]
    %v206 = vld [vmem:[#allocation5 + $0x70] sm:$0xff]
    %v207 = vld [vmem:[#allocation5 + $0x78] sm:$0xff]
    %v208 = vld [vmem:[#allocation5 + $0x80] sm:$0xff]
    %v209 = vld [vmem:[#allocation5 + $0x88] sm:$0xff]
    %v210 = vld [vmem:[#allocation5 + $0x90] sm:$0xff]
    %v211 = vld [vmem:[#allocation5 + $0x98] sm:$0xff]
    %v212 = vld [vmem:[#allocation5 + $0xa0] sm:$0xff]
    %v213 = vld [vmem:[#allocation5 + $0xa8] sm:$0xff]
    %v214 = vld [vmem:[#allocation5 + $0xb0] sm:$0xff]
    %v215 = vld [vmem:[#allocation5 + $0xb8] sm:$0xff]
    %v216 = vld [vmem:[#allocation5 + $0xc0] sm:$0xff]
    %v217 = vld [vmem:[#allocation5 + $0xc8] sm:$0xff]
    %v218 = vld [vmem:[#allocation5 + $0xd0] sm:$0xff]
    %v219 = vld [vmem:[#allocation5 + $0xd8] sm:$0xff]
    %v220 = vld [vmem:[#allocation5 + $0xe0] sm:$0xff]
    %v221 = vld [vmem:[#allocation5 + $0xe8] sm:$0xff]
    %v222 = vld [vmem:[#allocation5 + $0xf0] sm:$0xff]
    %v223 = vld [vmem:[#allocation5 + $0xf8] sm:$0xff]
    %v224 = vld [vmem:[#allocation5 + $0x100] sm:$0xff]
    %v225 = vld [vmem:[#allocation5 + $0x108] sm:$0xff]
    %v226 = vld [vmem:[#allocation5 + $0x110] sm:$0xff]
    %v227 = vld [vmem:[#allocation5 + $0x118] sm:$0xff]
    %v228 = vld [vmem:[#allocation5 + $0x120] sm:$0xff]
    %v229 = vld [vmem:[#allocation5 + $0x128] sm:$0xff]
    %v230 = vld [vmem:[#allocation5 + $0x130] sm:$0xff]
    %v231 = vld [vmem:[#allocation5 + $0x138] sm:$0xff]
    %v232 = vld [vmem:[#allocation5 + $0x140] sm:$0xff]
    %v233 = vld [vmem:[#allocation5 + $0x148] sm:$0xff]
    %v234 = vld [vmem:[#allocation5 + $0x150] sm:$0xff]
    %v235 = vld [vmem:[#allocation5 + $0x158] sm:$0xff]
    %v236 = vld [vmem:[#allocation5 + $0x160] sm:$0xff]
    %v237 = vld [vmem:[#allocation5 + $0x168] sm:$0xff]
    %v238 = vld [vmem:[#allocation5 + $0x170] sm:$0xff]
    %v239 = vld [vmem:[#allocation5 + $0x178] sm:$0xff]
    %v240 = vld [vmem:[#allocation5 + $0x180] sm:$0xff]
    %v241 = vld [vmem:[#allocation5 + $0x188] sm:$0xff]
    %v242 = vld [vmem:[#allocation5 + $0x190] sm:$0xff]
    %v243 = vld [vmem:[#allocation5 + $0x198] sm:$0xff]
    %v244 = vld [vmem:[#allocation5 + $0x1a0] sm:$0xff]
    %v245 = vld [vmem:[#allocation5 + $0x1a8] sm:$0xff]
    %v246 = vld [vmem:[#allocation5 + $0x1b0] sm:$0xff]
    %v247 = vld [vmem:[#allocation5 + $0x1b8] sm:$0xff]
    %v248 = vld [vmem:[#allocation5 + $0x1c0] sm:$0xff]
    %v249 = vld [vmem:[#allocation5 + $0x1c8] sm:$0xff]
    %v250 = vld [vmem:[#allocation5 + $0x1d0] sm:$0xff]
    %v251 = vld [vmem:[#allocation5 + $0x1d8] sm:$0xff]
    %v252 = vld [vmem:[#allocation5 + $0x1e0] sm:$0xff]
    %v253 = vld [vmem:[#allocation5 + $0x1e8] sm:$0xff]
    %v254 = vld [vmem:[#allocation5 + $0x1f0] sm:$0xff]
    %v255 = vld [vmem:[#allocation5 + $0x1f8] sm:$0xff]
    %v256 = vld [vmem:[%s4] ss:$4 sm:$0x3]
    %v258 = vlaneseq
    %v259 = vshrl.u32 %v258, 7
    %v260 = vsub.s32 0, %v259
    %v261 = vrot.slane %v256, %v260
    %v262 = vlaneseq
    %v263 = vshrl.u32 %v262, 7
    %v264 = vsub.s32 1, %v263
    %v265 = vrot.slane %v256, %v264
    %268 = vmatprep.subr.mxu0 %v193
    %269 = vmatpush1.msra.mxu0 %v192
    %270 = vmatprep.subr.mxu0 %v195
    %271 = vmatpush1.msra.mxu0 %v194
    %272 = vmatprep.subr.mxu0 %v197
    %273 = vmatpush1.msra.mxu0 %v196
    %274 = vmatprep.subr.mxu0 %v199
    %275 = vmatpush1.msra.mxu0 %v198
    %276 = vmatprep.subr.mxu0 %v201
    %277 = vmatpush1.msra.mxu0 %v200
    %278 = vmatprep.subr.mxu0 %v203
    %279 = vmatpush1.msra.mxu0 %v202
    %280 = vmatprep.subr.mxu0 %v205
    %281 = vmatpush1.msra.mxu0 %v204
    %282 = vmatprep.subr.mxu0 %v207
    %283 = vmatpush1.msra.mxu0 %v206
    %284 = vmatprep.subr.mxu0 %v209
    %285 = vmatpush1.msra.mxu0 %v208
    %286 = vmatprep.subr.mxu0 %v211
    %287 = vmatpush1.msra.mxu0 %v210
    %288 = vmatprep.subr.mxu0 %v213
    %289 = vmatpush1.msra.mxu0 %v212
    %290 = vmatprep.subr.mxu0 %v215
    %291 = vmatpush1.msra.mxu0 %v214
    %292 = vmatprep.subr.mxu0 %v217
    %293 = vmatpush1.msra.mxu0 %v216
    %294 = vmatprep.subr.mxu0 %v219
    %295 = vmatpush1.msra.mxu0 %v218
    %296 = vmatprep.subr.mxu0 %v221
    %297 = vmatpush1.msra.mxu0 %v220
    %298 = vmatprep.subr.mxu0 %v223
    %299 = vmatpush1.msra.mxu0 %v222
    %300 = vmatprep.subr.mxu0 %v225
    %301 = vmatpush1.msra.mxu0 %v224
    %302 = vmatprep.subr.mxu0 %v227
    %303 = vmatpush1.msra.mxu0 %v226
    %304 = vmatprep.subr.mxu0 %v229
    %305 = vmatpush1.msra.mxu0 %v228
    %306 = vmatprep.subr.mxu0 %v231
    %307 = vmatpush1.msra.mxu0 %v230
    %308 = vmatprep.subr.mxu0 %v233
    %309 = vmatpush1.msra.mxu0 %v232
    %310 = vmatprep.subr.mxu0 %v235
    %311 = vmatpush1.msra.mxu0 %v234
    %312 = vmatprep.subr.mxu0 %v237
    %313 = vmatpush1.msra.mxu0 %v236
    %314 = vmatprep.subr.mxu0 %v239
    %315 = vmatpush1.msra.mxu0 %v238
    %316 = vmatprep.subr.mxu0 %v241
    %317 = vmatpush1.msra.mxu0 %v240
    %318 = vmatprep.subr.mxu0 %v243
    %319 = vmatpush1.msra.mxu0 %v242
    %320 = vmatprep.subr.mxu0 %v245
    %321 = vmatpush1.msra.mxu0 %v244
    %322 = vmatprep.subr.mxu0 %v247
    %323 = vmatpush1.msra.mxu0 %v246
    %324 = vmatprep.subr.mxu0 %v249
    %325 = vmatpush1.msra.mxu0 %v248
    %326 = vmatprep.subr.mxu0 %v251
    %327 = vmatpush1.msra.mxu0 %v250
    %328 = vmatprep.subr.mxu0 %v253
    %329 = vmatpush1.msra.mxu0 %v252
    %330 = vmatprep.subr.mxu0 %v255
    %331 = vmatpush1.msra.mxu0 %v254
    %332 = vmatprep.mubr.f32.mxu0 %v189
    %333 = vmatmul.mubr.f32.gmra.mrb[0].mxu0 %v188
    %v334 = vpop.f32.mrb[0].mxu0
    %v335 = vadd.f32 %v261, %v334
    %v336 = vpop.f32.mrb[0].mxu0
    %v337 = vadd.f32 %v265, %v336
    %338 = vmatprep.mubr.f32.mxu0 %v191
    %339 = vmatmul.mubr.f32.gmra.mrb[0].mxu0 %v190
    %v340 = vpop.f32.mrb[0].mxu0
    %v341 = vadd.f32 %v261, %v340
    %v342 = vpop.f32.mrb[0].mxu0
    %v343 = vadd.f32 %v265, %v342
    %344 = vdwg.mxu0
    %v345 = vadd.f32 %v335, %v337
    %346 = vadd.xlane.f32.xlu0 %v345
    %v347 = vpop.xlane.xlu0 %346
    %v348 = vadd.f32 %v341, %v343
    %349 = vadd.xlane.f32.xlu0 %v348
    %v350 = vpop.xlane.xlu0 %349
    %v351 = vmul.f32 %v347, 0.00390625
    %v352 = vmul.f32 %v350, 0.00390625
    %v353 = vmul.f32 %v335, %v335
    %v354 = vmul.f32 %v337, %v337
    %v355 = vmul.f32 %v341, %v341
    %v356 = vmul.f32 %v343, %v343
    %v357 = vadd.f32 %v353, %v354
    %358 = vadd.xlane.f32.xlu0 %v357
    %v359 = vpop.xlane.xlu0 %358
    %v360 = vadd.f32 %v355, %v356
    %361 = vadd.xlane.f32.xlu0 %v360
    %v362 = vpop.xlane.xlu0 %361
    %v363 = vmul.f32 %v359, 0.00390625
    %v364 = vmul.f32 %v362, 0.00390625
    %v365 = vmul.f32 %v351, %v351
    %v366 = vmul.f32 %v352, %v352
    %v367 = vsub.f32 %v363, %v365
    %v368 = vsub.f32 %v364, %v366
    %v369 = vmax.f32 %v367, 0.0
    %v370 = vmax.f32 %v368, 0.0
    %v371 = vadd.f32 %v369, 1e-05
    %v372 = vadd.f32 %v370, 1e-05
    %v373 = vrsqrt.pop %v371
    %v374 = vrsqrt.pop %v372
    %v375 = vsub.f32 %v335, %v351
    %v376 = vsub.f32 %v337, %v351
    %v377 = vsub.f32 %v341, %v352
    %v378 = vsub.f32 %v343, %v352
    %v379 = vmul.f32 %v375, %v373
    %v380 = vmul.f32 %v376, %v373
    %v381 = vmul.f32 %v377, %v374
    %v382 = vmul.f32 %v378, %v374
    %s383 = scalar_lea.vmem %s4, 1
    %v384 = vld [vmem:[%s383] ss:$4 sm:$0x3]
    %v386 = vlaneseq
    %v387 = vshrl.u32 %v386, 7
    %v388 = vsub.s32 0, %v387
    %v389 = vrot.slane %v384, %v388
    %v390 = vlaneseq
    %v391 = vshrl.u32 %v390, 7
    %v392 = vsub.s32 1, %v391
    %v393 = vrot.slane %v384, %v392
    %v396 = vmul.f32 %v379, %v389
    %v397 = vmul.f32 %v380, %v393
    %v398 = vmul.f32 %v381, %v389
    %v399 = vmul.f32 %v382, %v393
    %s400 = scalar_lea.vmem %s4, 2
    %v401 = vld [vmem:[%s400] ss:$4 sm:$0x3]
    %v403 = vlaneseq
    %v404 = vshrl.u32 %v403, 7
    %v405 = vsub.s32 0, %v404
    %v406 = vrot.slane %v401, %v405
    %v407 = vlaneseq
    %v408 = vshrl.u32 %v407, 7
    %v409 = vsub.s32 1, %v408
    %v410 = vrot.slane %v401, %v409
    %v413 = vadd.f32 %v396, %v406
    %v414 = vadd.f32 %v397, %v410
    %v415 = vadd.f32 %v398, %v406
    %v416 = vadd.f32 %v399, %v410
    %417 = vst [vmem:[#allocation7] sm:$0xff] %v413
    %418 = vst [vmem:[#allocation7 + $0x8] sm:$0xff] %v414
    %419 = vst [vmem:[#allocation7 + $0x10] sm:$0xff] %v415
    %420 = vst [vmem:[#allocation7 + $0x18] sm:$0xff] %v416
    // Predicated region
    $region30: #{audio_projector.1} parent=1 // pred_check
      _
    $region31: #{audio_projector.1} parent=1 // pred_check_branch
      %422 = sbr.rel (0) target = $region33
    $region32: #{audio_projector.1} parent=1 // pred_region
      %s424 = ssub.s32 512, 512
      %425 = vsyncadd [#allocation4], %s424
      %s426 = sshll.u32 [#allocation7], 4
      %s427 = int_to_ptr.vmem [resolvable:$true] %s426
      %432 = dma.vmem_to_hbm [thread:$0]  %s427, 512, %s5, [#allocation4], 256, 256, 16
    $region33: #{audio_projector.1} parent=1 // pred_fallthru
      _
    // Predicated region
    $region34: #{audio_projector.1} parent=1 // pred_check
      _
    $region35: #{audio_projector.1} parent=1 // pred_check_branch
      %434 = sbr.rel (0) target = $region37
    $region36: #{audio_projector.1} parent=1 // pred_region
      %435 = dma.done [#allocation4], 512
    $region37: #{audio_projector.1} parent=1 // pred_fallthru
      _
    %436 = vsyncpa [#allocation3], 1
    %437 = vsyncpa [#allocation6], 1
    %438 = vsyncpa [#allocation4], 1

</llo_original>
